<compile_context>
chip_gen: v5e
topology: v5e:2x2
jax: 0.10.0
libtpu: 0.0.40
codegen_flags: <defaults>
</compile_context>

<pallas_src>
import jax
import jax.numpy as jnp
from jax.experimental import pallas as pl
from jax.experimental.pallas import tpu as pltpu

LANE = 128
H = LANE                                  # every feature dim zero-padded to 128
MATMUL_DTYPE = jnp.bfloat16               # MXU-native; set jnp.float32 for exact f32
SUBLANE = 16 if MATMUL_DTYPE == jnp.bfloat16 else 8


# ----------------------------------------------------------------------------
# Shared math: used verbatim by the Pallas kernel body and (in plain JAX) as
# the correctness reference, so both see identical quantization.
# ----------------------------------------------------------------------------
def _forward_math(adj, x, W, B):
    """adj: f32 [n_pad, n_pad] normalized adjacency (zero padded rows/cols)
       x  : mm  [n_pad, 128]   zero-padded node features
       W  : mm  [128, 768]     packed weights [Wfc0|Wc0g0|Wc0g1|Wc1g0|Wc1g1|Wout]
       B  : f32 [8, 128]       packed biases, rows 0..5 in the same order
       returns f32 [n_pad, 128] padded logits."""
    f32 = jnp.float32
    mm = W.dtype

    def b(i):                              # (1,128) bias row, broadcasts over nodes
        return B[i:i + 1, :]

    # fc0 and cell0/step0 feature transforms share LHS x -> one 256-wide matmul
    t1 = jnp.dot(x, W[:, 0:2 * H], preferred_element_type=f32)
    h0 = t1[:, 0:H] + b(0)                 # fc0 output == GraphEhanced residual h0
    xw_c0_e0 = t1[:, H:2 * H]              # x  @ W_cell0_gnn0

    # cell0/step1 and cell1/step0 feature transforms share LHS h0 -> one matmul
    t2 = jnp.dot(h0.astype(mm), W[:, 2 * H:4 * H], preferred_element_type=f32)
    xw_c0_e1 = t2[:, 0:H]                  # h0 @ W_cell0_gnn1
    xw_c1_e0 = t2[:, H:2 * H]              # h0 @ W_cell1_gnn0

    # ---- cell 0: one 256-wide adjacency aggregation (kept f32), then
    #      GCN bias + GraphEhanced (+h0) + activation, 'add' combine ----
    agg0 = jnp.dot(adj, jnp.concatenate([xw_c0_e0, xw_c0_e1], axis=1),
                   preferred_element_type=f32)
    e0 = jnp.maximum(agg0[:, 0:H] + b(1) + h0, 0.0)      # relu
    e1 = jnp.tanh(agg0[:, H:2 * H] + b(2) + h0)          # tanh
    s1 = e0 + e1                                         # 'add' combine

    # ---- cell 1 ----
    xw_c1_e1 = jnp.dot(s1.astype(mm), W[:, 4 * H:5 * H],
                       preferred_element_type=f32)       # s1 @ W_cell1_gnn1
    agg1 = jnp.dot(adj, jnp.concatenate([xw_c1_e0, xw_c1_e1], axis=1),
                   preferred_element_type=f32)
    e0 = jnp.maximum(agg1[:, 0:H] + b(3) + h0, 0.0)
    e1 = jnp.tanh(agg1[:, H:2 * H] + b(4) + h0)
    s1 = e0 + e1

    # fc_out
    return jnp.dot(s1.astype(mm), W[:, 5 * H:6 * H],
                   preferred_element_type=f32) + b(5)


def _micro_gnn_kernel(adj_ref, x_ref, w_ref, b_ref, o_ref):
    o_ref[...] = _forward_math(adj_ref[...], x_ref[...], w_ref[...], b_ref[...])


# ----------------------------------------------------------------------------
# One-time prep (hoisted out of the per-forward path): adjacency normalization,
# padding to lane-dense shapes, weight/bias packing, bf16 casts.
# ----------------------------------------------------------------------------
def normalized_adjacency(edge_index, num_nodes):
    # GCN: A_hat = D^{-1/2} (A + I_remaining) D^{-1/2}; messages flow src -> dst.
    src, dst = edge_index
    adj = jnp.zeros((num_nodes, num_nodes), jnp.float32).at[dst, src].add(1.0)
    diag = jnp.diagonal(adj)
    adj = adj + jnp.diag(jnp.where(diag == 0.0, 1.0, 0.0))
    deg = jnp.sum(adj, axis=1)
    d_inv_sqrt = jnp.where(deg > 0.0, 1.0 / jnp.sqrt(deg), 0.0)
    return d_inv_sqrt[:, None] * adj * d_inv_sqrt[None, :]


def init_params(key, num_feat, num_hidden, num_classes):
    def lin(key, fin, fout):
        k1, k2 = jax.random.split(key)
        bound = 1.0 / jnp.sqrt(fin)
        w = jax.random.uniform(k1, (fin, fout), jnp.float32, -bound, bound)
        b = jax.random.uniform(k2, (1, fout), jnp.float32, -bound, bound)
        return {"w": w, "b": b}

    keys = jax.random.split(key, 8)
    return {
        "fc0": lin(keys[0], num_feat, num_hidden),
        "cells": [
            {"gnn0": lin(keys[1], num_feat, num_hidden),
             "gnn1": lin(keys[2], num_hidden, num_hidden)},
            {"gnn0": lin(keys[3], num_hidden, num_hidden),
             "gnn1": lin(keys[4], num_hidden, num_hidden)},
        ],
        "fc_out": lin(keys[5], num_hidden, num_classes),
    }


def _round_up(v, m):
    return ((v + m - 1) // m) * m


def _pad_w(w):   # zero rows/cols -> padded lanes stay exactly 0 downstream
    return jnp.pad(w, ((0, H - w.shape[0]), (0, H - w.shape[1])))


def _pad_b(b):
    return jnp.pad(b.reshape(1, -1), ((0, 0), (0, H - b.shape[-1])))


def prepare(params, x, edge_index):
    n, num_feat = x.shape
    n_pad = _round_up(max(n, SUBLANE), SUBLANE)

    adj = normalized_adjacency(edge_index, n)
    adj_p = jnp.pad(adj, ((0, n_pad - n), (0, n_pad - n)))          # f32
    x_p = jnp.pad(x, ((0, n_pad - n), (0, H - num_feat))).astype(MATMUL_DTYPE)

    order = [params["fc0"],
             params["cells"][0]["gnn0"], params["cells"][0]["gnn1"],
             params["cells"][1]["gnn0"], params["cells"][1]["gnn1"],
             params["fc_out"]]
    W = jnp.concatenate([_pad_w(p["w"]) for p in order],
                        axis=1).astype(MATMUL_DTYPE)                # [128, 768]
    B = jnp.concatenate([_pad_b(p["b"]) for p in order]
                        + [jnp.zeros((2, H), jnp.float32)], axis=0)  # [8, 128]
    return adj_p, x_p, W, B


# ----------------------------------------------------------------------------
# Per-call forward: one gridless, fully VMEM-resident pallas_call.
# ----------------------------------------------------------------------------
def make_forward(num_nodes, num_classes, n_pad):
    vmem = pl.BlockSpec(memory_space=pltpu.MemorySpace.VMEM)
    call = pl.pallas_call(
        _micro_gnn_kernel,
        out_shape=jax.ShapeDtypeStruct((n_pad, H), jnp.float32),
        in_specs=[vmem, vmem, vmem, vmem],
        out_specs=vmem,
        # Total VMEM footprint ~0.2 MiB -> no vmem_limit_bytes / grid needed.
        # TODO(synk): for large graphs (N in the thousands) the dense N x N adj
        # must move to memory_space=pl.ANY with a node-block grid (v7x has only
        # 64 MiB VMEM); for batches of graphs add a leading "parallel" grid axis
        # so v7x's two TensorCores split the work.
    )

    @jax.jit
    def forward(adj_p, x_p, W, B):
        return call(adj_p, x_p, W, B)[:num_nodes, :num_classes]

    return forward


# ----------------------------------------------------------------------------
if __name__ == "__main__":
    NUM_NODES = 12      # deliberately NOT a multiple of the sublane tile (16)
    NUM_FEAT = 16
    NUM_HIDDEN = 32
    NUM_CLASSES = 8

    key = jax.random.PRNGKey(0)
    k_x, k_p = jax.random.split(key)

    x = jax.random.normal(k_x, (NUM_NODES, NUM_FEAT), jnp.float32)
    # deterministic ring graph (both directions)
    src = jnp.arange(NUM_NODES, dtype=jnp.int32)
    dst = (src + 1) % NUM_NODES
    edge_index = jnp.stack(
        [jnp.concatenate([src, dst]), jnp.concatenate([dst, src])], axis=0)

    params = init_params(k_p, NUM_FEAT, NUM_HIDDEN, NUM_CLASSES)

    # one-time prep (hoisted out of the per-forward path)
    adj_p, x_p, W, B = prepare(params, x, edge_index)
    n_pad = adj_p.shape[0]

    forward = make_forward(NUM_NODES, NUM_CLASSES, n_pad)
    logits = forward(adj_p, x_p, W, B)
    jax.block_until_ready(logits)

    # correctness: identical math in plain JAX (same bf16 quantization),
    # with n < n_pad so the padding path is exercised.
    ref = _forward_math(adj_p, x_p, W, B)[:NUM_NODES, :NUM_CLASSES]
    assert logits.shape == (NUM_NODES, NUM_CLASSES)
    assert bool(jnp.all(jnp.isfinite(logits)))
    assert bool(jnp.allclose(logits, ref, atol=2e-2, rtol=2e-2))
    print("KERNEL_OK")
</pallas_src>

<mosaic_0001>
module attributes {stable_mosaic.version = 11 : i64} {
  func.func @_micro_gnn_kernel(%arg0: memref<16x16xf32, #tpu.memory_space<vmem>>, %arg1: memref<16x128xbf16, #tpu.memory_space<vmem>>, %arg2: memref<128x768xbf16, #tpu.memory_space<vmem>>, %arg3: memref<8x128xf32, #tpu.memory_space<vmem>>, %arg4: memref<16x128xf32, #tpu.memory_space<vmem>>) attributes {dimension_semantics = [], scalar_prefetch = 0 : i64, scratch_operands = 0 : i64, tpu.core_type = #tpu.core_type<tc>} {
    %c0 = arith.constant 0 : index
    %c0_0 = arith.constant 0 : index
    %0 = vector.load %arg0[%c0, %c0_0] : memref<16x16xf32, #tpu.memory_space<vmem>>, vector<16x16xf32>
    %c0_1 = arith.constant 0 : index
    %c0_2 = arith.constant 0 : index
    %1 = vector.load %arg1[%c0_1, %c0_2] : memref<16x128xbf16, #tpu.memory_space<vmem>>, vector<16x128xbf16>
    %c0_3 = arith.constant 0 : index
    %c0_4 = arith.constant 0 : index
    %2 = vector.load %arg2[%c0_3, %c0_4] : memref<128x768xbf16, #tpu.memory_space<vmem>>, vector<128x768xbf16>
    %c0_5 = arith.constant 0 : index
    %c0_6 = arith.constant 0 : index
    %3 = vector.load %arg3[%c0_5, %c0_6] : memref<8x128xf32, #tpu.memory_space<vmem>>, vector<8x128xf32>
    %4 = vector.extract_strided_slice %2 {offsets = [0, 0], sizes = [128, 256], strides = [1, 1]} : vector<128x768xbf16> to vector<128x256xbf16>
    %cst = arith.constant dense<0.000000e+00> : vector<16x256xf32>
    %5 = tpu.matmul %1, %4, %cst {dimension_numbers = #tpu.dot_dimension_numbers<[1], [0], [0], [1], [0, 0, 1, 1], [], []>} : vector<16x128xbf16>, vector<128x256xbf16>, vector<16x256xf32> -> vector<16x256xf32>
    %6 = vector.extract_strided_slice %5 {offsets = [0, 0], sizes = [16, 128], strides = [1, 1]} : vector<16x256xf32> to vector<16x128xf32>
    %7 = vector.extract_strided_slice %3 {offsets = [0, 0], sizes = [1, 128], strides = [1, 1]} : vector<8x128xf32> to vector<1x128xf32>
    %8 = vector.broadcast %7 : vector<1x128xf32> to vector<16x128xf32>
    %9 = arith.addf %6, %8 : vector<16x128xf32>
    %10 = vector.extract_strided_slice %5 {offsets = [0, 128], sizes = [16, 128], strides = [1, 1]} : vector<16x256xf32> to vector<16x128xf32>
    %11 = arith.truncf %9 : vector<16x128xf32> to vector<16x128xbf16>
    %12 = vector.extract_strided_slice %2 {offsets = [0, 256], sizes = [128, 256], strides = [1, 1]} : vector<128x768xbf16> to vector<128x256xbf16>
    %cst_7 = arith.constant dense<0.000000e+00> : vector<16x256xf32>
    %13 = tpu.matmul %11, %12, %cst_7 {dimension_numbers = #tpu.dot_dimension_numbers<[1], [0], [0], [1], [0, 0, 1, 1], [], []>} : vector<16x128xbf16>, vector<128x256xbf16>, vector<16x256xf32> -> vector<16x256xf32>
    %14 = vector.extract_strided_slice %13 {offsets = [0, 0], sizes = [16, 128], strides = [1, 1]} : vector<16x256xf32> to vector<16x128xf32>
    %15 = vector.extract_strided_slice %13 {offsets = [0, 128], sizes = [16, 128], strides = [1, 1]} : vector<16x256xf32> to vector<16x128xf32>
    %16 = tpu.concatenate %10, %14 in 1 : vector<16x128xf32>, vector<16x128xf32> -> vector<16x256xf32>
    %cst_8 = arith.constant dense<0.000000e+00> : vector<16x256xf32>
    %17 = tpu.matmul %0, %16, %cst_8 {dimension_numbers = #tpu.dot_dimension_numbers<[1], [0], [0], [1], [0, 0, 1, 1], [], []>} : vector<16x16xf32>, vector<16x256xf32>, vector<16x256xf32> -> vector<16x256xf32>
    %18 = vector.extract_strided_slice %17 {offsets = [0, 0], sizes = [16, 128], strides = [1, 1]} : vector<16x256xf32> to vector<16x128xf32>
    %19 = vector.extract_strided_slice %3 {offsets = [1, 0], sizes = [1, 128], strides = [1, 1]} : vector<8x128xf32> to vector<1x128xf32>
    %20 = vector.broadcast %19 : vector<1x128xf32> to vector<16x128xf32>
    %21 = arith.addf %18, %20 : vector<16x128xf32>
    %22 = arith.addf %21, %9 : vector<16x128xf32>
    %cst_9 = arith.constant 0.000000e+00 : f32
    %23 = vector.broadcast %cst_9 : f32 to vector<16x128xf32>
    %24 = arith.maximumf %22, %23 : vector<16x128xf32>
    %25 = vector.extract_strided_slice %17 {offsets = [0, 128], sizes = [16, 128], strides = [1, 1]} : vector<16x256xf32> to vector<16x128xf32>
    %26 = vector.extract_strided_slice %3 {offsets = [2, 0], sizes = [1, 128], strides = [1, 1]} : vector<8x128xf32> to vector<1x128xf32>
    %27 = vector.broadcast %26 : vector<1x128xf32> to vector<16x128xf32>
    %28 = arith.addf %25, %27 : vector<16x128xf32>
    %29 = arith.addf %28, %9 : vector<16x128xf32>
    %30 = math.tanh %29 : vector<16x128xf32>
    %31 = arith.addf %24, %30 : vector<16x128xf32>
    %32 = arith.truncf %31 : vector<16x128xf32> to vector<16x128xbf16>
    %33 = vector.extract_strided_slice %2 {offsets = [0, 512], sizes = [128, 128], strides = [1, 1]} : vector<128x768xbf16> to vector<128x128xbf16>
    %cst_10 = arith.constant dense<0.000000e+00> : vector<16x128xf32>
    %34 = tpu.matmul %32, %33, %cst_10 {dimension_numbers = #tpu.dot_dimension_numbers<[1], [0], [0], [1], [0, 0, 1, 1], [], []>} : vector<16x128xbf16>, vector<128x128xbf16>, vector<16x128xf32> -> vector<16x128xf32>
    %35 = tpu.concatenate %15, %34 in 1 : vector<16x128xf32>, vector<16x128xf32> -> vector<16x256xf32>
    %cst_11 = arith.constant dense<0.000000e+00> : vector<16x256xf32>
    %36 = tpu.matmul %0, %35, %cst_11 {dimension_numbers = #tpu.dot_dimension_numbers<[1], [0], [0], [1], [0, 0, 1, 1], [], []>} : vector<16x16xf32>, vector<16x256xf32>, vector<16x256xf32> -> vector<16x256xf32>
    %37 = vector.extract_strided_slice %36 {offsets = [0, 0], sizes = [16, 128], strides = [1, 1]} : vector<16x256xf32> to vector<16x128xf32>
    %38 = vector.extract_strided_slice %3 {offsets = [3, 0], sizes = [1, 128], strides = [1, 1]} : vector<8x128xf32> to vector<1x128xf32>
    %39 = vector.broadcast %38 : vector<1x128xf32> to vector<16x128xf32>
    %40 = arith.addf %37, %39 : vector<16x128xf32>
    %41 = arith.addf %40, %9 : vector<16x128xf32>
    %cst_12 = arith.constant 0.000000e+00 : f32
    %42 = vector.broadcast %cst_12 : f32 to vector<16x128xf32>
    %43 = arith.maximumf %41, %42 : vector<16x128xf32>
    %44 = vector.extract_strided_slice %36 {offsets = [0, 128], sizes = [16, 128], strides = [1, 1]} : vector<16x256xf32> to vector<16x128xf32>
    %45 = vector.extract_strided_slice %3 {offsets = [4, 0], sizes = [1, 128], strides = [1, 1]} : vector<8x128xf32> to vector<1x128xf32>
    %46 = vector.broadcast %45 : vector<1x128xf32> to vector<16x128xf32>
    %47 = arith.addf %44, %46 : vector<16x128xf32>
    %48 = arith.addf %47, %9 : vector<16x128xf32>
    %49 = math.tanh %48 : vector<16x128xf32>
    %50 = arith.addf %43, %49 : vector<16x128xf32>
    %51 = arith.truncf %50 : vector<16x128xf32> to vector<16x128xbf16>
    %52 = vector.extract_strided_slice %2 {offsets = [0, 640], sizes = [128, 128], strides = [1, 1]} : vector<128x768xbf16> to vector<128x128xbf16>
    %cst_13 = arith.constant dense<0.000000e+00> : vector<16x128xf32>
    %53 = tpu.matmul %51, %52, %cst_13 {dimension_numbers = #tpu.dot_dimension_numbers<[1], [0], [0], [1], [0, 0, 1, 1], [], []>} : vector<16x128xbf16>, vector<128x128xbf16>, vector<16x128xf32> -> vector<16x128xf32>
    %54 = vector.extract_strided_slice %3 {offsets = [5, 0], sizes = [1, 128], strides = [1, 1]} : vector<8x128xf32> to vector<1x128xf32>
    %55 = vector.broadcast %54 : vector<1x128xf32> to vector<16x128xf32>
    %56 = arith.addf %53, %55 : vector<16x128xf32>
    %c0_14 = arith.constant 0 : index
    %c0_15 = arith.constant 0 : index
    %57 = vector.load %arg4[%c0_14, %c0_15] : memref<16x128xf32, #tpu.memory_space<vmem>>, vector<16x128xf32>
    tpu.vector_store %arg4[%c0_14, %c0_15], %56 {strides = array<i32>} : memref<16x128xf32, #tpu.memory_space<vmem>>, vector<16x128xf32>,
    return
  }
}

</mosaic_0001>

<llo_original>
// kernel: forward.1
$region0: #{forward.1}
  #allocation0 [shape = 'u32[]', space=smem, size = 0x4, offset = 0x4, fixed_abs, tag = 'smem constant byte address 0x4 - core index']
  #allocation1 [shape = 'u32[72,128]{1,0:T(1,128)}', space=vmem, size = 0x9000, scoped, tag = 'internal scratch']
  %s0 = inlined_call_operand.hbm [shape: f32[16,16], index: 0, kind: input, shape index: {}]
  %s1 = inlined_call_operand.hbm [shape: bf16[16,128], index: 1, kind: input, shape index: {}]
  %s2 = inlined_call_operand.hbm [shape: bf16[128,768], index: 2, kind: input, shape index: {}]
  %s3 = inlined_call_operand.hbm [shape: f32[8,128], index: 3, kind: input, shape index: {}]
  %s4 = inlined_call_operand.vmem [shape: f32[16,128], index: 4, kind: output, shape index: {}]
  %s5 = sld [smem:[#allocation0]]
  $region42: #{forward.1} parent=0
    _
  %s7 = ssub.s32 1, %s5
  %s8 = scalar_select 0, %s7, %s5
  $region1: #{forward.1} parent=0
    #allocation2 [shape = 'u8[8192]{0}', space=vmem, size = 0x2000, scoped, tag = 'input window, operand 0, single buffered']
    #allocation3 [shape = 's32[1]{0}', space=sflag, size = 0x4, scoped, tag = 'scoped memory for forward.1']
    #allocation4 [shape = 'u8[4096]{0}', space=vmem, size = 0x1000, scoped, tag = 'input window, operand 1, single buffered']
    #allocation5 [shape = 's32[1]{0}', space=sflag, size = 0x4, scoped, tag = 'scoped memory for forward.1']
    #allocation6 [shape = 'u8[196608]{0}', space=vmem, size = 0x30000, scoped, tag = 'input window, operand 2, single buffered']
    #allocation7 [shape = 'u8[4096]{0}', space=vmem, size = 0x1000, scoped, tag = 'input window, operand 3, single buffered']
    #allocation8 [shape = 's32[1]{0}', space=sflag, size = 0x4, scoped, tag = 'scoped memory for forward.1']
    %9 = vsyncpa [#allocation3], 0
    %10 = vsyncpa [#allocation5], 0
    %11 = vsyncpa [#allocation8], 0
    // Predicated region
    $region2: #{forward.1} parent=1 // pred_check
      _
    $region3: #{forward.1} parent=1 // pred_check_branch
      %13 = sbr.rel (0) target = $region5
    $region4: #{forward.1} parent=1 // pred_region
      %15 = vsyncadd [#allocation3], 0
      %s16 = sshll.u32 %s0, 4
      %s17 = int_to_ptr.hbm [resolvable:$true] %s16
      %s18 = sshll.u32 [#allocation2], 4
      %s19 = int_to_ptr.vmem [resolvable:$true] %s18
      %24 = dma.hbm_to_vmem [thread:$0]  %s17, 256, %s19, [#allocation3], 128, 128, 8
    $region5: #{forward.1} parent=1 // pred_fallthru
      _
    // Predicated region
    $region6: #{forward.1} parent=1 // pred_check
      _
    $region7: #{forward.1} parent=1 // pred_check_branch
      %26 = sbr.rel (0) target = $region9
    $region8: #{forward.1} parent=1 // pred_region
      %28 = vsyncadd [#allocation5], 0
      %s29 = sshll.u32 %s1, 4
      %s30 = int_to_ptr.hbm [resolvable:$true] %s29
      %s31 = sshll.u32 [#allocation4], 4
      %s32 = int_to_ptr.vmem [resolvable:$true] %s31
      %37 = dma.hbm_to_vmem [thread:$0]  %s30, 128, %s32, [#allocation5], 64, 64, 4
    $region9: #{forward.1} parent=1 // pred_fallthru
      _
    // Predicated region
    $region10: #{forward.1} parent=1 // pred_check
      _
    $region11: #{forward.1} parent=1 // pred_check_branch
      %39 = sbr.rel (0) target = $region13
    $region12: #{forward.1} parent=1 // pred_region
      %41 = vsyncadd [#allocation5], 0
      %s42 = sshll.u32 %s2, 4
      %s43 = int_to_ptr.hbm [resolvable:$true] %s42
      %s44 = sshll.u32 [#allocation6], 4
      %s45 = int_to_ptr.vmem [resolvable:$true] %s44
      %50 = dma.hbm_to_vmem [thread:$0]  %s43, 6144, %s45, [#allocation5], 384, 384, 24
    $region13: #{forward.1} parent=1 // pred_fallthru
      _
    // Predicated region
    $region14: #{forward.1} parent=1 // pred_check
      _
    $region15: #{forward.1} parent=1 // pred_check_branch
      %52 = sbr.rel (0) target = $region17
    $region16: #{forward.1} parent=1 // pred_region
      %54 = vsyncadd [#allocation8], 0
      %s56 = sshll.u32 %s3, 4
      %s57 = int_to_ptr.hbm [resolvable:$true] %s56
      %s58 = sshll.u32 [#allocation7], 4
      %s59 = int_to_ptr.vmem [resolvable:$true] %s58
      %61 = dma.hbm_to_vmem [thread:$0]  %s57, 128, %s59, [#allocation8]
    $region17: #{forward.1} parent=1 // pred_fallthru
      _
    // Predicated region
    $region18: #{forward.1} parent=1 // pred_check
      _
    $region19: #{forward.1} parent=1 // pred_check_branch
      %63 = sbr.rel (0) target = $region21
    $region20: #{forward.1} parent=1 // pred_region
      %65 = dma.done [#allocation3], 256
    $region21: #{forward.1} parent=1 // pred_fallthru
      _
    // Predicated region
    $region22: #{forward.1} parent=1 // pred_check
      _
    $region23: #{forward.1} parent=1 // pred_check_branch
      %67 = sbr.rel (0) target = $region25
    $region24: #{forward.1} parent=1 // pred_region
      %69 = dma.done [#allocation5], 128
    $region25: #{forward.1} parent=1 // pred_fallthru
      _
    // Predicated region
    $region26: #{forward.1} parent=1 // pred_check
      _
    $region27: #{forward.1} parent=1 // pred_check_branch
      %71 = sbr.rel (0) target = $region29
    $region28: #{forward.1} parent=1 // pred_region
      %73 = dma.done [#allocation5], 6144
    $region29: #{forward.1} parent=1 // pred_fallthru
      _
    // Predicated region
    $region30: #{forward.1} parent=1 // pred_check
      _
    $region31: #{forward.1} parent=1 // pred_check_branch
      %75 = sbr.rel (0) target = $region33
    $region32: #{forward.1} parent=1 // pred_region
      %77 = dma.done [#allocation8], 128
    $region33: #{forward.1} parent=1 // pred_fallthru
      _
    %v78 = vld [vmem:[#allocation2] sm:$0xff]
    %v79 = vld [vmem:[#allocation2 + $0x8] sm:$0xff]
    %v80 = vld [vmem:[#allocation4] sm:$0xf]
    %v81 = vld [vmem:[#allocation4 + $0x4] sm:$0xf]
    %v82 = vld [vmem:[#allocation6] sm:$0xff]
    %v83 = vld [vmem:[#allocation6 + $0x8] sm:$0xff]
    %v84 = vld [vmem:[#allocation6 + $0x10] sm:$0xff]
    %v85 = vld [vmem:[#allocation6 + $0x18] sm:$0xff]
    %v86 = vld [vmem:[#allocation6 + $0x20] sm:$0xff]
    %v87 = vld [vmem:[#allocation6 + $0x28] sm:$0xff]
    %v88 = vld [vmem:[#allocation6 + $0x30] sm:$0xff]
    %v89 = vld [vmem:[#allocation6 + $0x38] sm:$0xff]
    %v90 = vld [vmem:[#allocation6 + $0x40] sm:$0xff]
    %v91 = vld [vmem:[#allocation6 + $0x48] sm:$0xff]
    %v92 = vld [vmem:[#allocation6 + $0x50] sm:$0xff]
    %v93 = vld [vmem:[#allocation6 + $0x58] sm:$0xff]
    %v94 = vld [vmem:[#allocation6 + $0x60] sm:$0xff]
    %v95 = vld [vmem:[#allocation6 + $0x68] sm:$0xff]
    %v96 = vld [vmem:[#allocation6 + $0x70] sm:$0xff]
    %v97 = vld [vmem:[#allocation6 + $0x78] sm:$0xff]
    %v98 = vld [vmem:[#allocation6 + $0x80] sm:$0xff]
    %v99 = vld [vmem:[#allocation6 + $0x88] sm:$0xff]
    %v100 = vld [vmem:[#allocation6 + $0x90] sm:$0xff]
    %v101 = vld [vmem:[#allocation6 + $0x98] sm:$0xff]
    %v102 = vld [vmem:[#allocation6 + $0xa0] sm:$0xff]
    %v103 = vld [vmem:[#allocation6 + $0xa8] sm:$0xff]
    %v104 = vld [vmem:[#allocation6 + $0xb0] sm:$0xff]
    %v105 = vld [vmem:[#allocation6 + $0xb8] sm:$0xff]
    %v106 = vld [vmem:[#allocation6 + $0xc0] sm:$0xff]
    %v107 = vld [vmem:[#allocation6 + $0xc8] sm:$0xff]
    %v108 = vld [vmem:[#allocation6 + $0xd0] sm:$0xff]
    %v109 = vld [vmem:[#allocation6 + $0xd8] sm:$0xff]
    %v110 = vld [vmem:[#allocation6 + $0xe0] sm:$0xff]
    %v111 = vld [vmem:[#allocation6 + $0xe8] sm:$0xff]
    %v112 = vld [vmem:[#allocation6 + $0xf0] sm:$0xff]
    %v113 = vld [vmem:[#allocation6 + $0xf8] sm:$0xff]
    %v114 = vld [vmem:[#allocation6 + $0x100] sm:$0xff]
    %v115 = vld [vmem:[#allocation6 + $0x108] sm:$0xff]
    %v116 = vld [vmem:[#allocation6 + $0x110] sm:$0xff]
    %v117 = vld [vmem:[#allocation6 + $0x118] sm:$0xff]
    %v118 = vld [vmem:[#allocation6 + $0x120] sm:$0xff]
    %v119 = vld [vmem:[#allocation6 + $0x128] sm:$0xff]
    %v120 = vld [vmem:[#allocation6 + $0x130] sm:$0xff]
    %v121 = vld [vmem:[#allocation6 + $0x138] sm:$0xff]
    %v122 = vld [vmem:[#allocation6 + $0x140] sm:$0xff]
    %v123 = vld [vmem:[#allocation6 + $0x148] sm:$0xff]
    %v124 = vld [vmem:[#allocation6 + $0x150] sm:$0xff]
    %v125 = vld [vmem:[#allocation6 + $0x158] sm:$0xff]
    %v126 = vld [vmem:[#allocation6 + $0x160] sm:$0xff]
    %v127 = vld [vmem:[#allocation6 + $0x168] sm:$0xff]
    %v128 = vld [vmem:[#allocation6 + $0x170] sm:$0xff]
    %v129 = vld [vmem:[#allocation6 + $0x178] sm:$0xff]
    %v130 = vld [vmem:[#allocation7] sm:$0xff]
    %v133 = vunpack.c.l.b16 %v80
    %v134 = vunpack.c.l.b16 %v81
    %v135 = vpack.c.b16 %v134, %v133
    %v153 = vunpack.c.l.b16 %v82
    %v154 = vunpack.c.h.b16 %v82
    %v155 = vunpack.c.l.b16 %v85
    %v156 = vunpack.c.h.b16 %v85
    %v157 = vunpack.c.l.b16 %v88
    %v158 = vunpack.c.h.b16 %v88
    %v159 = vunpack.c.l.b16 %v91
    %v160 = vunpack.c.h.b16 %v91
    %v161 = vunpack.c.l.b16 %v94
    %v162 = vunpack.c.h.b16 %v94
    %v163 = vunpack.c.l.b16 %v97
    %v164 = vunpack.c.h.b16 %v97
    %v165 = vunpack.c.l.b16 %v100
    %v166 = vunpack.c.h.b16 %v100
    %v167 = vunpack.c.l.b16 %v103
    %v168 = vunpack.c.h.b16 %v103
    %v169 = vunpack.c.l.b16 %v106
    %v170 = vunpack.c.h.b16 %v106
    %v171 = vunpack.c.l.b16 %v109
    %v172 = vunpack.c.h.b16 %v109
    %v173 = vunpack.c.l.b16 %v112
    %v174 = vunpack.c.h.b16 %v112
    %v175 = vunpack.c.l.b16 %v115
    %v176 = vunpack.c.h.b16 %v115
    %v177 = vunpack.c.l.b16 %v118
    %v178 = vunpack.c.h.b16 %v118
    %v179 = vunpack.c.l.b16 %v121
    %v180 = vunpack.c.h.b16 %v121
    %v181 = vunpack.c.l.b16 %v124
    %v182 = vunpack.c.h.b16 %v124
    %v183 = vunpack.c.l.b16 %v127
    %v184 = vunpack.c.h.b16 %v127
    %v185 = vpack.c.b16 %v155, %v153
    %v186 = vpack.c.b16 %v156, %v154
    %v187 = vpack.c.b16 %v159, %v157
    %v188 = vpack.c.b16 %v160, %v158
    %v189 = vpack.c.b16 %v163, %v161
    %v190 = vpack.c.b16 %v164, %v162
    %v191 = vpack.c.b16 %v167, %v165
    %v192 = vpack.c.b16 %v168, %v166
    %v193 = vpack.c.b16 %v171, %v169
    %v194 = vpack.c.b16 %v172, %v170
    %v195 = vpack.c.b16 %v175, %v173
    %v196 = vpack.c.b16 %v176, %v174
    %v197 = vpack.c.b16 %v179, %v177
    %v198 = vpack.c.b16 %v180, %v178
    %v199 = vpack.c.b16 %v183, %v181
    %v200 = vpack.c.b16 %v184, %v182
    %217 = vmatpush.bf16.msra.mxu0 %v199
    %218 = vmatpush.bf16.msra.mxu0 %v197
    %219 = vmatpush.bf16.msra.mxu0 %v195
    %220 = vmatpush.bf16.msra.mxu0 %v193
    %221 = vmatpush.bf16.msra.mxu0 %v191
    %222 = vmatpush.bf16.msra.mxu0 %v189
    %223 = vmatpush.bf16.msra.mxu0 %v187
    %224 = vmatpush.bf16.msra.mxu0 %v185
    %225 = vmatmul.bf16.gmra.mxu0 %v135
    %v226 = vpop.f32.mrf.mxu0
    %v227 = vadd.f32 0.0, %v226
    %v228 = vpop.f32.mrf.mxu0
    %v229 = vadd.f32 0.0, %v228
    %230 = vdwg.mxu0
    %231 = vmatpush.bf16.msra.mxu0 %v200
    %232 = vmatpush.bf16.msra.mxu0 %v198
    %233 = vmatpush.bf16.msra.mxu0 %v196
    %234 = vmatpush.bf16.msra.mxu0 %v194
    %235 = vmatpush.bf16.msra.mxu0 %v192
    %236 = vmatpush.bf16.msra.mxu0 %v190
    %237 = vmatpush.bf16.msra.mxu0 %v188
    %238 = vmatpush.bf16.msra.mxu0 %v186
    %239 = vmatmul.bf16.gmra.mxu0 %v135
    %v240 = vpop.f32.mrf.mxu0
    %v241 = vadd.f32 0.0, %v240
    %v242 = vpop.f32.mrf.mxu0
    %v243 = vadd.f32 0.0, %v242
    %244 = vdwg.mxu0
    %v245 = vperm.slane %v130, 0
    %v246 = vadd.f32 %v227, %v245
    %v247 = vadd.f32 %v229, %v245
    %v248 = vpack.c.bf16 %v247, %v246
    %v265 = vunpack.c.l.b16 %v83
    %v266 = vunpack.c.h.b16 %v83
    %v267 = vunpack.c.l.b16 %v86
    %v268 = vunpack.c.h.b16 %v86
    %v269 = vunpack.c.l.b16 %v89
    %v270 = vunpack.c.h.b16 %v89
    %v271 = vunpack.c.l.b16 %v92
    %v272 = vunpack.c.h.b16 %v92
    %v273 = vunpack.c.l.b16 %v95
    %v274 = vunpack.c.h.b16 %v95
    %v275 = vunpack.c.l.b16 %v98
    %v276 = vunpack.c.h.b16 %v98
    %v277 = vunpack.c.l.b16 %v101
    %v278 = vunpack.c.h.b16 %v101
    %v279 = vunpack.c.l.b16 %v104
    %v280 = vunpack.c.h.b16 %v104
    %v281 = vunpack.c.l.b16 %v107
    %v282 = vunpack.c.h.b16 %v107
    %v283 = vunpack.c.l.b16 %v110
    %v284 = vunpack.c.h.b16 %v110
    %v285 = vunpack.c.l.b16 %v113
    %v286 = vunpack.c.h.b16 %v113
    %v287 = vunpack.c.l.b16 %v116
    %v288 = vunpack.c.h.b16 %v116
    %v289 = vunpack.c.l.b16 %v119
    %v290 = vunpack.c.h.b16 %v119
    %v291 = vunpack.c.l.b16 %v122
    %v292 = vunpack.c.h.b16 %v122
    %v293 = vunpack.c.l.b16 %v125
    %v294 = vunpack.c.h.b16 %v125
    %v295 = vunpack.c.l.b16 %v128
    %v296 = vunpack.c.h.b16 %v128
    %v297 = vpack.c.b16 %v267, %v265
    %v298 = vpack.c.b16 %v268, %v266
    %v299 = vpack.c.b16 %v271, %v269
    %v300 = vpack.c.b16 %v272, %v270
    %v301 = vpack.c.b16 %v275, %v273
    %v302 = vpack.c.b16 %v276, %v274
    %v303 = vpack.c.b16 %v279, %v277
    %v304 = vpack.c.b16 %v280, %v278
    %v305 = vpack.c.b16 %v283, %v281
    %v306 = vpack.c.b16 %v284, %v282
    %v307 = vpack.c.b16 %v287, %v285
    %v308 = vpack.c.b16 %v288, %v286
    %v309 = vpack.c.b16 %v291, %v289
    %v310 = vpack.c.b16 %v292, %v290
    %v311 = vpack.c.b16 %v295, %v293
    %v312 = vpack.c.b16 %v296, %v294
    %329 = vmatpush.bf16.msra.mxu0 %v311
    %330 = vmatpush.bf16.msra.mxu0 %v309
    %331 = vmatpush.bf16.msra.mxu0 %v307
    %332 = vmatpush.bf16.msra.mxu0 %v305
    %333 = vmatpush.bf16.msra.mxu0 %v303
    %334 = vmatpush.bf16.msra.mxu0 %v301
    %335 = vmatpush.bf16.msra.mxu0 %v299
    %336 = vmatpush.bf16.msra.mxu0 %v297
    %337 = vmatmul.bf16.gmra.mxu0 %v248
    %v338 = vpop.f32.mrf.mxu0
    %v339 = vadd.f32 0.0, %v338
    %v340 = vpop.f32.mrf.mxu0
    %v341 = vadd.f32 0.0, %v340
    %342 = vdwg.mxu0
    %343 = vmatpush.bf16.msra.mxu0 %v312
    %344 = vmatpush.bf16.msra.mxu0 %v310
    %345 = vmatpush.bf16.msra.mxu0 %v308
    %346 = vmatpush.bf16.msra.mxu0 %v306
    %347 = vmatpush.bf16.msra.mxu0 %v304
    %348 = vmatpush.bf16.msra.mxu0 %v302
    %349 = vmatpush.bf16.msra.mxu0 %v300
    %350 = vmatpush.bf16.msra.mxu0 %v298
    %351 = vmatmul.bf16.gmra.mxu0 %v248
    %v352 = vpop.f32.mrf.mxu0
    %v353 = vadd.f32 0.0, %v352
    %v354 = vpop.f32.mrf.mxu0
    %v355 = vadd.f32 0.0, %v354
    %356 = vdwg.mxu0
    %vm357 = vcmask 130048
    %v359 = vsel %vm357, %v78, 0
    %v362 = vsel %vm357, %v79, 0
    %364 = vmatpush.msra.mxu0 0.0
    %365 = vmatpush.msra.mxu0 0.0
    %366 = vmatpush.msra.mxu0 0.0
    %367 = vmatpush.msra.mxu0 0.0
    %368 = vmatpush.msra.mxu0 0.0
    %369 = vmatpush.msra.mxu0 0.0
    %370 = vmatpush.msra.mxu0 0.0
    %371 = vmatpush.msra.mxu0 0.0
    %372 = vmatpush.msra.mxu0 0.0
    %373 = vmatpush.msra.mxu0 0.0
    %374 = vmatpush.msra.mxu0 0.0
    %375 = vmatpush.msra.mxu0 0.0
    %376 = vmatpush.msra.mxu0 0.0
    %377 = vmatpush.msra.mxu0 0.0
    %378 = vmatpush.msra.mxu0 %v243
    %379 = vmatpush.msra.mxu0 %v241
    %380 = vmatmul.f32.gmra.mxu0 %v359
    %v381 = vpop.f32.mrf.mxu0
    %v382 = vadd.f32 0.0, %v381
    %383 = vmatmul.f32.gmra.mxu0 %v362
    %v384 = vpop.f32.mrf.mxu0
    %v385 = vadd.f32 0.0, %v384
    %386 = vdwg.mxu0
    %387 = vmatpush.msra.mxu0 0.0
    %388 = vmatpush.msra.mxu0 0.0
    %389 = vmatpush.msra.mxu0 0.0
    %390 = vmatpush.msra.mxu0 0.0
    %391 = vmatpush.msra.mxu0 0.0
    %392 = vmatpush.msra.mxu0 0.0
    %393 = vmatpush.msra.mxu0 0.0
    %394 = vmatpush.msra.mxu0 0.0
    %395 = vmatpush.msra.mxu0 0.0
    %396 = vmatpush.msra.mxu0 0.0
    %397 = vmatpush.msra.mxu0 0.0
    %398 = vmatpush.msra.mxu0 0.0
    %399 = vmatpush.msra.mxu0 0.0
    %400 = vmatpush.msra.mxu0 0.0
    %401 = vmatpush.msra.mxu0 %v341
    %402 = vmatpush.msra.mxu0 %v339
    %403 = vmatmul.f32.gmra.mxu0 %v359
    %v404 = vpop.f32.mrf.mxu0
    %v405 = vadd.f32 0.0, %v404
    %406 = vmatmul.f32.gmra.mxu0 %v362
    %v407 = vpop.f32.mrf.mxu0
    %v408 = vadd.f32 0.0, %v407
    %409 = vdwg.mxu0
    %v410 = vperm.slane %v130, 1
    %v411 = vadd.f32 %v382, %v410
    %v412 = vadd.f32 %v385, %v410
    %v413 = vadd.f32 %v411, %v246
    %v414 = vadd.f32 %v412, %v247
    %v415 = vmax.f32 %v413, 0.0
    %v416 = vmax.f32 %v414, 0.0
    %v417 = vperm.slane %v130, 2
    %v418 = vadd.f32 %v405, %v417
    %v419 = vadd.f32 %v408, %v417
    %v420 = vadd.f32 %v418, %v246
    %v421 = vadd.f32 %v419, %v247
    %v422 = vtanh.pop %v420
    %v423 = vtanh.pop %v421
    %v424 = vadd.f32 %v415, %v422
    %v425 = vadd.f32 %v416, %v423
    %v426 = vpack.c.bf16 %v425, %v424
    %v443 = vunpack.c.l.b16 %v84
    %v444 = vunpack.c.l.b16 %v87
    %v445 = vunpack.c.l.b16 %v90
    %v446 = vunpack.c.l.b16 %v93
    %v447 = vunpack.c.l.b16 %v96
    %v448 = vunpack.c.l.b16 %v99
    %v449 = vunpack.c.l.b16 %v102
    %v450 = vunpack.c.l.b16 %v105
    %v451 = vunpack.c.l.b16 %v108
    %v452 = vunpack.c.l.b16 %v111
    %v453 = vunpack.c.l.b16 %v114
    %v454 = vunpack.c.l.b16 %v117
    %v455 = vunpack.c.l.b16 %v120
    %v456 = vunpack.c.l.b16 %v123
    %v457 = vunpack.c.l.b16 %v126
    %v458 = vunpack.c.l.b16 %v129
    %v459 = vpack.c.b16 %v444, %v443
    %v460 = vpack.c.b16 %v446, %v445
    %v461 = vpack.c.b16 %v448, %v447
    %v462 = vpack.c.b16 %v450, %v449
    %v463 = vpack.c.b16 %v452, %v451
    %v464 = vpack.c.b16 %v454, %v453
    %v465 = vpack.c.b16 %v456, %v455
    %v466 = vpack.c.b16 %v458, %v457
    %475 = vmatpush.bf16.msra.mxu0 %v466
    %476 = vmatpush.bf16.msra.mxu0 %v465
    %477 = vmatpush.bf16.msra.mxu0 %v464
    %478 = vmatpush.bf16.msra.mxu0 %v463
    %479 = vmatpush.bf16.msra.mxu0 %v462
    %480 = vmatpush.bf16.msra.mxu0 %v461
    %481 = vmatpush.bf16.msra.mxu0 %v460
    %482 = vmatpush.bf16.msra.mxu0 %v459
    %483 = vmatmul.bf16.gmra.mxu0 %v426
    %v484 = vpop.f32.mrf.mxu0
    %v485 = vadd.f32 0.0, %v484
    %v486 = vpop.f32.mrf.mxu0
    %v487 = vadd.f32 0.0, %v486
    %488 = vdwg.mxu0
    %489 = vmatpush.msra.mxu0 0.0
    %490 = vmatpush.msra.mxu0 0.0
    %491 = vmatpush.msra.mxu0 0.0
    %492 = vmatpush.msra.mxu0 0.0
    %493 = vmatpush.msra.mxu0 0.0
    %494 = vmatpush.msra.mxu0 0.0
    %495 = vmatpush.msra.mxu0 0.0
    %496 = vmatpush.msra.mxu0 0.0
    %497 = vmatpush.msra.mxu0 0.0
    %498 = vmatpush.msra.mxu0 0.0
    %499 = vmatpush.msra.mxu0 0.0
    %500 = vmatpush.msra.mxu0 0.0
    %501 = vmatpush.msra.mxu0 0.0
    %502 = vmatpush.msra.mxu0 0.0
    %503 = vmatpush.msra.mxu0 %v355
    %504 = vmatpush.msra.mxu0 %v353
    %505 = vmatmul.f32.gmra.mxu0 %v359
    %v506 = vpop.f32.mrf.mxu0
    %v507 = vadd.f32 0.0, %v506
    %508 = vmatmul.f32.gmra.mxu0 %v362
    %v509 = vpop.f32.mrf.mxu0
    %v510 = vadd.f32 0.0, %v509
    %511 = vdwg.mxu0
    %512 = vmatpush.msra.mxu0 0.0
    %513 = vmatpush.msra.mxu0 0.0
    %514 = vmatpush.msra.mxu0 0.0
    %515 = vmatpush.msra.mxu0 0.0
    %516 = vmatpush.msra.mxu0 0.0
    %517 = vmatpush.msra.mxu0 0.0
    %518 = vmatpush.msra.mxu0 0.0
    %519 = vmatpush.msra.mxu0 0.0
    %520 = vmatpush.msra.mxu0 0.0
    %521 = vmatpush.msra.mxu0 0.0
    %522 = vmatpush.msra.mxu0 0.0
    %523 = vmatpush.msra.mxu0 0.0
    %524 = vmatpush.msra.mxu0 0.0
    %525 = vmatpush.msra.mxu0 0.0
    %526 = vmatpush.msra.mxu0 %v487
    %527 = vmatpush.msra.mxu0 %v485
    %528 = vmatmul.f32.gmra.mxu0 %v359
    %v529 = vpop.f32.mrf.mxu0
    %v530 = vadd.f32 0.0, %v529
    %531 = vmatmul.f32.gmra.mxu0 %v362
    %v532 = vpop.f32.mrf.mxu0
    %v533 = vadd.f32 0.0, %v532
    %534 = vdwg.mxu0
    %v535 = vperm.slane %v130, 3
    %v536 = vadd.f32 %v507, %v535
    %v537 = vadd.f32 %v510, %v535
    %v538 = vadd.f32 %v536, %v246
    %v539 = vadd.f32 %v537, %v247
    %v540 = vmax.f32 %v538, 0.0
    %v541 = vmax.f32 %v539, 0.0
    %v542 = vperm.slane %v130, 4
    %v543 = vadd.f32 %v530, %v542
    %v544 = vadd.f32 %v533, %v542
    %v545 = vadd.f32 %v543, %v246
    %v546 = vadd.f32 %v544, %v247
    %v547 = vtanh.pop %v545
    %v548 = vtanh.pop %v546
    %v549 = vadd.f32 %v540, %v547
    %v550 = vadd.f32 %v541, %v548
    %v551 = vpack.c.bf16 %v550, %v549
    %v552 = vperm.slane %v130, 5
    %v553 = vunpack.c.h.b16 %v84
    %v554 = vunpack.c.h.b16 %v87
    %v555 = vunpack.c.h.b16 %v90
    %v556 = vunpack.c.h.b16 %v93
    %v557 = vunpack.c.h.b16 %v96
    %v558 = vunpack.c.h.b16 %v99
    %v559 = vunpack.c.h.b16 %v102
    %v560 = vunpack.c.h.b16 %v105
    %v561 = vunpack.c.h.b16 %v108
    %v562 = vunpack.c.h.b16 %v111
    %v563 = vunpack.c.h.b16 %v114
    %v564 = vunpack.c.h.b16 %v117
    %v565 = vunpack.c.h.b16 %v120
    %v566 = vunpack.c.h.b16 %v123
    %v567 = vunpack.c.h.b16 %v126
    %v568 = vunpack.c.h.b16 %v129
    %v569 = vpack.c.b16 %v554, %v553
    %v570 = vpack.c.b16 %v556, %v555
    %v571 = vpack.c.b16 %v558, %v557
    %v572 = vpack.c.b16 %v560, %v559
    %v573 = vpack.c.b16 %v562, %v561
    %v574 = vpack.c.b16 %v564, %v563
    %v575 = vpack.c.b16 %v566, %v565
    %v576 = vpack.c.b16 %v568, %v567
    %585 = vmatpush.bf16.msra.mxu0 %v576
    %586 = vmatpush.bf16.msra.mxu0 %v575
    %587 = vmatpush.bf16.msra.mxu0 %v574
    %588 = vmatpush.bf16.msra.mxu0 %v573
    %589 = vmatpush.bf16.msra.mxu0 %v572
    %590 = vmatpush.bf16.msra.mxu0 %v571
    %591 = vmatpush.bf16.msra.mxu0 %v570
    %592 = vmatpush.bf16.msra.mxu0 %v569
    %593 = vmatmul.bf16.gmra.mxu0 %v551
    %v594 = vpop.f32.mrf.mxu0
    %v595 = vadd.f32 %v552, %v594
    %v596 = vpop.f32.mrf.mxu0
    %v597 = vadd.f32 %v552, %v596
    %598 = vdwg.mxu0
    %599 = vst [vmem:[%s4] sm:$0xff] %v595
    %600 = vst [vmem:[%s4 + $0x8] sm:$0xff] %v597
    // Predicated region
    $region34: #{forward.1} parent=1 // pred_check
      _
    $region35: #{forward.1} parent=1 // pred_check_branch
      %602 = sbr.rel (0) target = $region37
    $region36: #{forward.1} parent=1 // pred_region
      _
    $region37: #{forward.1} parent=1 // pred_fallthru
      _
    // Predicated region
    $region38: #{forward.1} parent=1 // pred_check
      _
    $region39: #{forward.1} parent=1 // pred_check_branch
      %604 = sbr.rel (0) target = $region41
    $region40: #{forward.1} parent=1 // pred_region
      _
    $region41: #{forward.1} parent=1 // pred_fallthru
      _
    %605 = vsyncpa [#allocation3], 1
    %606 = vsyncpa [#allocation5], 1
    %607 = vsyncpa [#allocation8], 1

</llo_original>
